<compile_context>
chip_gen: v6e
topology: v6e:2x2x1
jax: 0.10.0
libtpu: 0.0.40
codegen_flags: <defaults>
</compile_context>

<pallas_src>
import jax
import jax.numpy as jnp
from jax.experimental import pallas as pl
from jax.experimental.pallas import tpu as pltpu


def _round_up(x, m):
    return ((x + m - 1) // m) * m


def _model_kernel(x_ref, s_ref, w_ref, o_ref, acc_ref):
    # Grid = (n_par, tiles_per_par); axis 1 is the row-reduction axis.
    i = pl.program_id(1)

    @pl.when(i == 0)
    def _():
        acc_ref[...] = jnp.zeros_like(acc_ref)

    # Single MXU matmul per tile: h = x_tile @ w, accumulated in f32.
    h = jnp.dot(x_ref[...], w_ref[...], preferred_element_type=jnp.float32)
    # VPU add into resident scratch (hides under the matmul).
    acc_ref[...] += jnp.maximum(h, 0.0)

    @pl.when(i == pl.num_programs(1) - 1)
    def _():
        # sum(relu(h) @ w) == sum(relu(h) * rowsum(w)); one full reduce per
        # parallel slice instead of per grid step.
        partial = jnp.sum(acc_ref[...] * s_ref[...])
        # Lane-dense (8,128) output block filled with the partial scalar.
        o_ref[...] = jnp.zeros_like(o_ref) + partial


def model_forward(x, w, *, tile_m=512, n_par=2):
    """x: (..., hidden); w: (hidden, hidden). Returns scalar sum(relu(x@w)@w)."""
    hidden = w.shape[-1]
    x2d = x.reshape(-1, hidden)          # keep input dtype (no forced f32 cast)
    m = x2d.shape[0]

    # Tile sizing: pick a large, bandwidth-friendly row tile; pad M (with zero
    # rows, which contribute exactly 0) so divisibility never constrains it.
    tile_m = min(tile_m, _round_up(max(m, 8), 8))
    tile_m = _round_up(tile_m, 8)
    tiles_total = pl.cdiv(m, tile_m)
    n_par = max(1, min(n_par, tiles_total))
    tiles_total = _round_up(tiles_total, n_par)
    tiles_per_par = tiles_total // n_par
    m_pad = tiles_total * tile_m
    if m_pad != m:
        x2d = jnp.pad(x2d, ((0, m_pad - m), (0, 0)))

    # Row-sums of w (s_k = sum_j w[k, j]), computed once in f32.
    s = jnp.sum(w, axis=1, dtype=jnp.float32).reshape(1, hidden)

    # Explicit VMEM budget: double-buffered x tile + resident w + scratch acc.
    x_bytes = 2 * tile_m * hidden * x2d.dtype.itemsize
    w_bytes = 2 * hidden * hidden * w.dtype.itemsize
    acc_bytes = tile_m * hidden * 4
    misc_bytes = 2 * hidden * 4 + 2 * 8 * 128 * 4
    vmem_limit = int(min(max(2 * (x_bytes + w_bytes + acc_bytes + misc_bytes),
                             16 << 20), 56 << 20))

    # TODO(synk): for hidden < 128, lanes/MXU columns run partially occupied;
    # packing multiple logical columns per lane-tile would recover that.

    out = pl.pallas_call(
        _model_kernel,
        out_shape=jax.ShapeDtypeStruct((n_par * 8, 128), jnp.float32),
        grid_spec=pltpu.PrefetchScalarGridSpec(
            num_scalar_prefetch=0,
            grid=(n_par, tiles_per_par),
            in_specs=[
                pl.BlockSpec((tile_m, hidden),
                             lambda p, i: (p * tiles_per_par + i, 0)),  # x tile
                pl.BlockSpec((1, hidden), lambda p, i: (0, 0)),         # rowsum(w)
                pl.BlockSpec((hidden, hidden), lambda p, i: (0, 0)),    # full w
            ],
            out_specs=pl.BlockSpec((8, 128), lambda p, i: (p, 0)),
            scratch_shapes=[pltpu.VMEM((tile_m, hidden), jnp.float32)],
        ),
        compiler_params=pltpu.CompilerParams(
            dimension_semantics=("parallel", "arbitrary"),
            vmem_limit_bytes=vmem_limit,
        ),
    )(x2d, s, w)

    # Each p-block holds its partial scalar broadcast over (8,128); combine.
    return jnp.sum(out[::8, 0])


if __name__ == "__main__":
    batch, seq, hidden = 2, 8, 32

    key = jax.random.PRNGKey(0)
    kx, kw = jax.random.split(key)
    x = jax.random.normal(kx, (batch, seq, hidden), dtype=jnp.float32)
    w = jax.random.normal(kw, (hidden, hidden), dtype=jnp.float32)

    result = model_forward(x, w)
    jax.block_until_ready(result)

    # Pure-JAX reference check (matches the PyTorch forward).
    ref = jnp.sum(jnp.maximum(x.reshape(-1, hidden) @ w, 0.0) @ w)
    assert jnp.allclose(result, ref, rtol=1e-3, atol=1e-2), (result, ref)

    print("KERNEL_OK")
</pallas_src>

<mosaic_0001>
module attributes {stable_mosaic.version = 11 : i64} {
  func.func @_model_kernel(%arg0: i32, %arg1: i32, %arg2: memref<16x32xf32, #tpu.memory_space<vmem>>, %arg3: memref<1x32xf32, #tpu.memory_space<vmem>>, %arg4: memref<32x32xf32, #tpu.memory_space<vmem>>, %arg5: memref<8x128xf32, #tpu.memory_space<vmem>>, %arg6: memref<16x32xf32, #tpu.memory_space<vmem>>) attributes {dimension_semantics = [#tpu.dimension_semantics<parallel>, #tpu.dimension_semantics<arbitrary>], iteration_bounds = array<i64: 1, 1>, scalar_prefetch = 0 : i64, scratch_operands = 1 : i64, tpu.core_type = #tpu.core_type<tc>, window_params = [{transform_indices = @transform_0, window_bounds = array<i64: 16, 32>}, {pipeline_mode = #tpu.pipeline_mode<synchronous>, transform_indices = @transform_1, window_bounds = array<i64: 1, 32>}, {pipeline_mode = #tpu.pipeline_mode<synchronous>, transform_indices = @transform_2, window_bounds = array<i64: 32, 32>}, {transform_indices = @transform_3, window_bounds = array<i64: 8, 128>}]} {
    %c0_i32 = arith.constant 0 : i32
    %0 = arith.cmpi eq, %arg1, %c0_i32 : i32
    %1 = arith.extui %0 : i1 to i32
    %c0_i32_0 = arith.constant 0 : i32
    %2 = arith.cmpi ne, %1, %c0_i32_0 : i32
    scf.if %2 {
      %cst_11 = arith.constant 0.000000e+00 : f32
      %14 = vector.broadcast %cst_11 : f32 to vector<16x32xf32>
      %c0_12 = arith.constant 0 : index
      %c0_13 = arith.constant 0 : index
      %15 = vector.load %arg6[%c0_12, %c0_13] : memref<16x32xf32, #tpu.memory_space<vmem>>, vector<16x32xf32>
      tpu.vector_store %arg6[%c0_12, %c0_13], %14 {strides = array<i32>} : memref<16x32xf32, #tpu.memory_space<vmem>>, vector<16x32xf32>,
    } else {
    }
    %c0 = arith.constant 0 : index
    %c0_1 = arith.constant 0 : index
    %3 = vector.load %arg2[%c0, %c0_1] : memref<16x32xf32, #tpu.memory_space<vmem>>, vector<16x32xf32>
    %c0_2 = arith.constant 0 : index
    %c0_3 = arith.constant 0 : index
    %4 = vector.load %arg4[%c0_2, %c0_3] : memref<32x32xf32, #tpu.memory_space<vmem>>, vector<32x32xf32>
    %cst = arith.constant dense<0.000000e+00> : vector<16x32xf32>
    %5 = tpu.matmul %3, %4, %cst {dimension_numbers = #tpu.dot_dimension_numbers<[1], [0], [0], [1], [0, 0, 1, 1], [], []>} : vector<16x32xf32>, vector<32x32xf32>, vector<16x32xf32> -> vector<16x32xf32>
    %c0_4 = arith.constant 0 : index
    %c0_5 = arith.constant 0 : index
    %6 = vector.load %arg6[%c0_4, %c0_5] : memref<16x32xf32, #tpu.memory_space<vmem>>, vector<16x32xf32>
    %cst_6 = arith.constant 0.000000e+00 : f32
    %7 = vector.broadcast %cst_6 : f32 to vector<16x32xf32>
    %8 = arith.maximumf %5, %7 : vector<16x32xf32>
    %9 = arith.addf %6, %8 : vector<16x32xf32>
    %c0_7 = arith.constant 0 : index
    %c0_8 = arith.constant 0 : index
    %10 = vector.load %arg6[%c0_7, %c0_8] : memref<16x32xf32, #tpu.memory_space<vmem>>, vector<16x32xf32>
    tpu.vector_store %arg6[%c0_7, %c0_8], %9 {strides = array<i32>} : memref<16x32xf32, #tpu.memory_space<vmem>>, vector<16x32xf32>,
    %c0_i32_9 = arith.constant 0 : i32
    %11 = arith.cmpi eq, %arg1, %c0_i32_9 : i32
    %12 = arith.extui %11 : i1 to i32
    %c0_i32_10 = arith.constant 0 : i32
    %13 = arith.cmpi ne, %12, %c0_i32_10 : i32
    scf.if %13 {
      %c0_11 = arith.constant 0 : index
      %c0_12 = arith.constant 0 : index
      %14 = vector.load %arg6[%c0_11, %c0_12] : memref<16x32xf32, #tpu.memory_space<vmem>>, vector<16x32xf32>
      %c0_13 = arith.constant 0 : index
      %c0_14 = arith.constant 0 : index
      %15 = vector.load %arg3[%c0_13, %c0_14] : memref<1x32xf32, #tpu.memory_space<vmem>>, vector<1x32xf32>
      %16 = vector.broadcast %15 : vector<1x32xf32> to vector<16x32xf32>
      %17 = arith.mulf %14, %16 : vector<16x32xf32>
      %18 = vector.shape_cast %17 : vector<16x32xf32> to vector<1x16x32xf32>
      %cst_15 = arith.constant dense<0.000000e+00> : vector<1xf32>
      %19 = vector.multi_reduction <add>, %18, %cst_15 [1, 2] : vector<1x16x32xf32> to vector<1xf32>
      %20 = vector.shape_cast %19 : vector<1xf32> to vector<1x1x1xf32>
      %21 = vector.extract %20[0, 0, 0] : f32 from vector<1x1x1xf32>
      %cst_16 = arith.constant 0.000000e+00 : f32
      %22 = vector.broadcast %cst_16 : f32 to vector<8x128xf32>
      %23 = vector.broadcast %21 : f32 to vector<8x128xf32>
      %24 = arith.addf %22, %23 : vector<8x128xf32>
      %c0_17 = arith.constant 0 : index
      %c0_18 = arith.constant 0 : index
      %25 = vector.load %arg5[%c0_17, %c0_18] : memref<8x128xf32, #tpu.memory_space<vmem>>, vector<8x128xf32>
      tpu.vector_store %arg5[%c0_17, %c0_18], %24 {strides = array<i32>} : memref<8x128xf32, #tpu.memory_space<vmem>>, vector<8x128xf32>,
    } else {
    }
    return
  }
  func.func @transform_0(%arg0: i32, %arg1: i32) -> (i32, i32) {
    %c1_i32 = arith.constant 1 : i32
    %0 = arith.muli %arg0, %c1_i32 : i32
    %1 = arith.addi %0, %arg1 : i32
    %c0_i32 = arith.constant 0 : i32
    %c0_i32_0 = arith.constant 0 : i32
    return %1, %c0_i32 : i32, i32
  }
  func.func @transform_1(%arg0: i32, %arg1: i32) -> (i32, i32) {
    %c0_i32 = arith.constant 0 : i32
    %c0_i32_0 = arith.constant 0 : i32
    %c0_i32_1 = arith.constant 0 : i32
    return %c0_i32, %c0_i32_0 : i32, i32
  }
  func.func @transform_2(%arg0: i32, %arg1: i32) -> (i32, i32) {
    %c0_i32 = arith.constant 0 : i32
    %c0_i32_0 = arith.constant 0 : i32
    %c0_i32_1 = arith.constant 0 : i32
    return %c0_i32, %c0_i32_0 : i32, i32
  }
  func.func @transform_3(%arg0: i32, %arg1: i32) -> (i32, i32) {
    %c0_i32 = arith.constant 0 : i32
    %c0_i32_0 = arith.constant 0 : i32
    return %arg0, %c0_i32 : i32, i32
  }
}

</mosaic_0001>

<llo_original>
// kernel: tpu_custom_call.1
$region0: #{tpu_custom_call.1}
  #allocation0 [shape = 'u32[]', space=smem, size = 0x4, offset = 0x4, fixed_abs, tag = 'smem constant byte address 0x4 - core index']
  #allocation1 [shape = 'u32[144,128]{1,0:T(1,128)}', space=vmem, size = 0x12000, scoped, tag = 'internal scratch']
  #allocation2 [shape = 'f32[16,32]{1,0:T(8,128)}', space=vmem, size = 0x2000, scoped, tag = 'scratch operand']
  %s0 = inlined_call_operand.hbm [shape: f32[16,32], index: 0, kind: input, shape index: {}]
  %s1 = inlined_call_operand.vmem [shape: f32[1,32], index: 1, kind: input, shape index: {}]
  %s2 = inlined_call_operand.hbm [shape: f32[32,32], index: 2, kind: input, shape index: {}]
  %s3 = inlined_call_operand.hbm [shape: f32[8,128], index: 3, kind: output, shape index: {}]
  %s4 = sld [smem:[#allocation0]]
  $region38: #{tpu_custom_call.1} parent=0
    _
  %s6 = ssub.s32 1, %s4
  %s7 = scalar_select 0, %s6, %s4
  $region1: #{tpu_custom_call.1} parent=0
    #allocation3 [shape = 'u8[8192]{0}', space=vmem, size = 0x2000, scoped, tag = 'input window, operand 0, single buffered']
    #allocation4 [shape = 's32[1]{0}', space=sflag, size = 0x4, scoped, tag = 'scoped memory for tpu_custom_call.1']
    #allocation5 [shape = 's32[1]{0}', space=sflag, size = 0x4, scoped, tag = 'scoped memory for tpu_custom_call.1']
    #allocation6 [shape = 'u8[16384]{0}', space=vmem, size = 0x4000, scoped, tag = 'input window, operand 2, single buffered']
    #allocation7 [shape = 's32[1]{0}', space=sflag, size = 0x4, scoped, tag = 'scoped memory for tpu_custom_call.1']
    #allocation8 [shape = 'u8[4096]{0}', space=vmem, size = 0x1000, scoped, tag = 'output window, operand 0, single buffered']
    %8 = vsyncpa [#allocation4], 0
    %9 = vsyncpa [#allocation7], 0
    %10 = vsyncpa [#allocation5], 0
    // Predicated region
    $region2: #{tpu_custom_call.1} parent=1 // pred_check
      _
    $region3: #{tpu_custom_call.1} parent=1 // pred_check_branch
      %12 = sbr.rel (0) target = $region5
    $region4: #{tpu_custom_call.1} parent=1 // pred_region
      %s13 = sadd.s32 0, 0
      %s14 = smul.u32 2, %s13
      %s16 = ssub.s32 256, 256
      %17 = vsyncadd [#allocation4], %s16
      %s18 = smul.addr %s14, 128
      %s19 = scalar_lea.hbm %s0, %s18
      %s20 = sshll.u32 [#allocation3], 4
      %s21 = int_to_ptr.vmem [resolvable:$true] %s20
      %26 = dma.hbm_to_vmem [thread:$0]  %s19, 256, %s21, [#allocation4], 128, 128, 8
    $region5: #{tpu_custom_call.1} parent=1 // pred_fallthru
      _
    // Predicated region
    $region6: #{tpu_custom_call.1} parent=1 // pred_check
      _
    $region7: #{tpu_custom_call.1} parent=1 // pred_check_branch
      %28 = sbr.rel (0) target = $region9
    $region8: #{tpu_custom_call.1} parent=1 // pred_region
      _
    $region9: #{tpu_custom_call.1} parent=1 // pred_fallthru
      _
    // Predicated region
    $region10: #{tpu_custom_call.1} parent=1 // pred_check
      _
    $region11: #{tpu_custom_call.1} parent=1 // pred_check_branch
      %30 = sbr.rel (0) target = $region13
    $region12: #{tpu_custom_call.1} parent=1 // pred_region
      %s32 = ssub.s32 512, 512
      %33 = vsyncadd [#allocation7], %s32
      %s34 = sshll.u32 [#allocation6], 4
      %s35 = int_to_ptr.vmem [resolvable:$true] %s34
      %40 = dma.hbm_to_vmem [thread:$0]  %s2, 512, %s35, [#allocation7], 128, 128, 8
    $region13: #{tpu_custom_call.1} parent=1 // pred_fallthru
      _
    // Predicated region
    $region14: #{tpu_custom_call.1} parent=1 // pred_check
      _
    $region15: #{tpu_custom_call.1} parent=1 // pred_check_branch
      %42 = sbr.rel (0) target = $region17
    $region16: #{tpu_custom_call.1} parent=1 // pred_region
      %43 = dma.done [#allocation4], 256
    $region17: #{tpu_custom_call.1} parent=1 // pred_fallthru
      _
    // Predicated region
    $region18: #{tpu_custom_call.1} parent=1 // pred_check
      _
    $region19: #{tpu_custom_call.1} parent=1 // pred_check_branch
      %45 = sbr.rel (0) target = $region21
    $region20: #{tpu_custom_call.1} parent=1 // pred_region
      %46 = dma.done [#allocation7], 512
    $region21: #{tpu_custom_call.1} parent=1 // pred_fallthru
      _
    %s47 = sadd.s32 0, 0
    %s48 = smul.u32 2, %s47
    %p49 = scmp.eq.s32.totalorder 0, 0
    // Predicated region
    $region22: #{tpu_custom_call.1} parent=1 // pred_check
      %p50 = pneg %p49
    $region23: #{tpu_custom_call.1} parent=1 // pred_check_branch
      %52 = sbr.rel (%p50) target = $region25
    $region24: #{tpu_custom_call.1} parent=1 // pred_region
      %vm53 = vcmask 261120
      %54 = vst.msk [vmem:[#allocation2] sm:$0xff] %vm53, 0.0
      %55 = vst.msk [vmem:[#allocation2 + $0x8] sm:$0xff] %vm53, 0.0
    $region25: #{tpu_custom_call.1} parent=1 // pred_fallthru
      _
    %v56 = vld [vmem:[#allocation3] sm:$0xff]
    %v57 = vld [vmem:[#allocation3 + $0x8] sm:$0xff]
    %v58 = vld [vmem:[#allocation6] sm:$0xff]
    %v59 = vld [vmem:[#allocation6 + $0x8] sm:$0xff]
    %v60 = vld [vmem:[#allocation6 + $0x10] sm:$0xff]
    %v61 = vld [vmem:[#allocation6 + $0x18] sm:$0xff]
    %vm62 = vcmask 261120
    %v64 = vsel %vm62, %v56, 0
    %v67 = vsel %vm62, %v57, 0
    %69 = vmatprep.subr.mxu0 0.0
    %70 = vmatpush1.msra.mxu0 0.0
    %71 = vmatprep.subr.mxu0 0.0
    %72 = vmatpush1.msra.mxu0 0.0
    %73 = vmatprep.subr.mxu0 0.0
    %74 = vmatpush1.msra.mxu0 0.0
    %75 = vmatprep.subr.mxu0 0.0
    %76 = vmatpush1.msra.mxu0 0.0
    %77 = vmatprep.subr.mxu0 0.0
    %78 = vmatpush1.msra.mxu0 0.0
    %79 = vmatprep.subr.mxu0 0.0
    %80 = vmatpush1.msra.mxu0 0.0
    %81 = vmatprep.subr.mxu0 0.0
    %82 = vmatpush1.msra.mxu0 0.0
    %83 = vmatprep.subr.mxu0 0.0
    %84 = vmatpush1.msra.mxu0 0.0
    %85 = vmatprep.subr.mxu0 0.0
    %86 = vmatpush1.msra.mxu0 0.0
    %87 = vmatprep.subr.mxu0 0.0
    %88 = vmatpush1.msra.mxu0 0.0
    %89 = vmatprep.subr.mxu0 0.0
    %90 = vmatpush1.msra.mxu0 0.0
    %91 = vmatprep.subr.mxu0 0.0
    %92 = vmatpush1.msra.mxu0 0.0
    %93 = vmatprep.subr.mxu0 0.0
    %94 = vmatpush1.msra.mxu0 %v61
    %95 = vmatprep.subr.mxu0 0.0
    %96 = vmatpush1.msra.mxu0 %v60
    %97 = vmatprep.subr.mxu0 0.0
    %98 = vmatpush1.msra.mxu0 %v59
    %99 = vmatprep.subr.mxu0 0.0
    %100 = vmatpush1.msra.mxu0 %v58
    %101 = vmatprep.subr.mxu0 0.0
    %102 = vmatpush2.msra.mxu0 0.0
    %103 = vmatprep.subr.mxu0 0.0
    %104 = vmatpush2.msra.mxu0 0.0
    %105 = vmatprep.subr.mxu0 0.0
    %106 = vmatpush2.msra.mxu0 0.0
    %107 = vmatprep.subr.mxu0 0.0
    %108 = vmatpush2.msra.mxu0 0.0
    %109 = vmatprep.subr.mxu0 0.0
    %110 = vmatpush2.msra.mxu0 0.0
    %111 = vmatprep.subr.mxu0 0.0
    %112 = vmatpush2.msra.mxu0 0.0
    %113 = vmatprep.subr.mxu0 0.0
    %114 = vmatpush2.msra.mxu0 0.0
    %115 = vmatprep.subr.mxu0 0.0
    %116 = vmatpush2.msra.mxu0 0.0
    %117 = vmatprep.subr.mxu0 0.0
    %118 = vmatpush2.msra.mxu0 0.0
    %119 = vmatprep.subr.mxu0 0.0
    %120 = vmatpush2.msra.mxu0 0.0
    %121 = vmatprep.subr.mxu0 0.0
    %122 = vmatpush2.msra.mxu0 0.0
    %123 = vmatprep.subr.mxu0 0.0
    %124 = vmatpush2.msra.mxu0 0.0
    %125 = vmatprep.subr.mxu0 0.0
    %126 = vmatpush2.msra.mxu0 0.0
    %127 = vmatprep.subr.mxu0 0.0
    %128 = vmatpush2.msra.mxu0 0.0
    %129 = vmatprep.subr.mxu0 0.0
    %130 = vmatpush2.msra.mxu0 0.0
    %131 = vmatprep.subr.mxu0 0.0
    %132 = vmatpush2.msra.mxu0 0.0
    %133 = vmatprep.mubr.f32.mxu0 0.0
    %134 = vmatmul.mubr.f32.gmra.mxu0 %v64
    %v135 = vpop.f32.mrf.mxu0
    %v136 = vadd.f32 0.0, %v135
    %v137 = vpop.f32.mrf.mxu0
    %138 = vmatprep.mubr.f32.mxu0 0.0
    %139 = vmatmul.mubr.f32.gmra.mxu0 %v67
    %v140 = vpop.f32.mrf.mxu0
    %v141 = vadd.f32 0.0, %v140
    %v142 = vpop.f32.mrf.mxu0
    %143 = vdwg.mxu0
    %v144 = vld [vmem:[#allocation2] sm:$0xff]
    %v145 = vld [vmem:[#allocation2 + $0x8] sm:$0xff]
    %v146 = vmax.f32 %v136, 0.0
    %v147 = vmax.f32 %v141, 0.0
    %v148 = vadd.f32 %v144, %v146
    %v149 = vadd.f32 %v145, %v147
    %150 = vst.msk [vmem:[#allocation2] sm:$0xff] %vm62, %v148
    %151 = vst.msk [vmem:[#allocation2 + $0x8] sm:$0xff] %vm62, %v149
    // Predicated region
    $region26: #{tpu_custom_call.1} parent=1 // pred_check
      %p152 = pneg %p49
    $region27: #{tpu_custom_call.1} parent=1 // pred_check_branch
      %154 = sbr.rel (%p152) target = $region29
    $region28: #{tpu_custom_call.1} parent=1 // pred_region
      %v155 = vld [vmem:[#allocation2] sm:$0xff]
      %v156 = vld [vmem:[#allocation2 + $0x8] sm:$0xff]
      %v157 = vld [vmem:[%s1] sm:$0x1]
      %v159 = vlaneseq
      %v160 = vshrl.u32 %v159, 7
      %v161 = vsub.s32 0, %v160
      %v162 = vrot.slane %v157, %v161
      %v164 = vmul.f32 %v155, %v162
      %v165 = vmul.f32 %v156, %v162
      %v166 = vsel %vm62, %v164, 0.0
      %v167 = vsel %vm62, %v165, 0.0
      %v168 = vadd.f32 %v166, %v167
      %169 = vadd.xlane.f32.xlu0 %v168
      %v170 = vpop.xlane.xlu0 %169
      %v171 = vrot.slane %v170, 4
      %v172 = vadd.f32 %v170, %v171
      %v173 = vrot.slane %v172, 2
      %v174 = vadd.f32 %v172, %v173
      %v175 = vrot.slane %v174, 1
      %v176 = vadd.f32 %v174, %v175
      %s177 = vtos %v176
      %v178 = vstv %s177
      %v179 = vadd.f32 %v178, 0.0
      %180 = vst [vmem:[#allocation8] sm:$0xff] %v179
    $region29: #{tpu_custom_call.1} parent=1 // pred_fallthru
      _
    // Predicated region
    $region30: #{tpu_custom_call.1} parent=1 // pred_check
      _
    $region31: #{tpu_custom_call.1} parent=1 // pred_check_branch
      %182 = sbr.rel (0) target = $region33
    $region32: #{tpu_custom_call.1} parent=1 // pred_region
      %s184 = ssub.s32 128, 128
      %185 = vsyncadd [#allocation5], %s184
      %s187 = sshll.u32 [#allocation8], 4
      %s188 = int_to_ptr.vmem [resolvable:$true] %s187
      %190 = dma.vmem_to_hbm [thread:$0]  %s188, 128, %s3, [#allocation5]
    $region33: #{tpu_custom_call.1} parent=1 // pred_fallthru
      _
    // Predicated region
    $region34: #{tpu_custom_call.1} parent=1 // pred_check
      _
    $region35: #{tpu_custom_call.1} parent=1 // pred_check_branch
      %192 = sbr.rel (0) target = $region37
    $region36: #{tpu_custom_call.1} parent=1 // pred_region
      %193 = dma.done [#allocation5], 128
    $region37: #{tpu_custom_call.1} parent=1 // pred_fallthru
      _
    %194 = vsyncpa [#allocation4], 1
    %195 = vsyncpa [#allocation7], 1
    %196 = vsyncpa [#allocation5], 1

</llo_original>
